<compile_context>
chip_gen: v5e
topology: v5e:2x2
jax: 0.10.0
libtpu: 0.0.40
codegen_flags: <defaults>
</compile_context>

<pallas_src>
import jax
import jax.numpy as jnp
from jax.experimental import pallas as pl
from jax.experimental.pallas import tpu as pltpu


def _round_up(x, m):
    return pl.cdiv(x, m) * m


def _gating_kernel(x_ref, w_ref, shift_ref, o_ref):
    # x_ref:     (B_TILE, C_in, TILE_S)  -- spatial on the lane axis (compute dtype)
    # w_ref:     (C_out, C_in)           -- resident folded weights (compute dtype)
    # shift_ref: (C_out, 1)              -- folded conv-bias + BN shift (f32)
    # o_ref:     (B_TILE, C_out, TILE_S) -- lane-dense output
    w = w_ref[...]
    shift = shift_ref[...]
    for b in range(x_ref.shape[0]):          # small static unroll over batch slab
        acc = jnp.dot(w, x_ref[b], preferred_element_type=jnp.float32)
        o_ref[b] = jnp.maximum(acc + shift, 0.0).astype(o_ref.dtype)


def unet_grid_gating_signal2(x_nchw, conv_w, conv_b,
                             bn_gamma=None, bn_beta=None, bn_mean=None,
                             bn_var=None, eps=1e-5, is_batchnorm=True,
                             compute_dtype=jnp.bfloat16,
                             max_tile_s=4096,
                             lane_target=2048,
                             vmem_budget_bytes=40 * 1024 * 1024):
    """x_nchw: (N, C_in, H, W).  conv_w: (C_out, C_in, 1, 1).  conv_b: (C_out,)."""
    N, C_in, H, W = x_nchw.shape
    C_out = conv_w.shape[0]
    S = H * W

    # ---- host-side parameter folding (free, O(C_in*C_out)) ----
    if is_batchnorm and any(p is None for p in (bn_gamma, bn_beta, bn_mean, bn_var)):
        raise ValueError("is_batchnorm=True requires bn_gamma/bn_beta/bn_mean/bn_var")
    w_mat = conv_w.reshape(C_out, C_in).astype(jnp.float32)
    if is_batchnorm:
        inv_std = 1.0 / jnp.sqrt(bn_var.astype(jnp.float32) + eps)
        scale = bn_gamma.astype(jnp.float32) * inv_std                       # (C_out,)
        shift = bn_beta.astype(jnp.float32) - bn_mean.astype(jnp.float32) * scale
    else:
        scale = jnp.ones((C_out,), jnp.float32)
        shift = jnp.zeros((C_out,), jnp.float32)
    w_eff = (w_mat * scale[:, None]).astype(compute_dtype)                   # (C_out, C_in)
    shift_eff = (conv_b.astype(jnp.float32) * scale + shift).reshape(C_out, 1)

    # ---- NCHW-native view: (N, C_in, S) with S on lanes (reshape is free) ----
    x_flat = x_nchw.reshape(N, C_in, S).astype(compute_dtype)
    out_dtype = x_nchw.dtype

    in_bytes = jnp.dtype(compute_dtype).itemsize
    out_bytes = jnp.dtype(out_dtype).itemsize

    # ---- spatial tiling: balanced 128-multiples, sized to the VMEM budget ----
    s_ceil = _round_up(S, 128)
    fixed_bytes = 2 * C_out * C_in * in_bytes + 2 * C_out * 4        # resident W + shift
    per_col = 2 * (C_in * in_bytes + C_out * out_bytes) + C_out * 4  # dbl-buf x/out + f32 acc
    tile_s_vmem = max(128, ((vmem_budget_bytes - fixed_bytes) // per_col) // 128 * 128)
    tile_cap = max(128, min(max_tile_s, tile_s_vmem))
    if N == 1:
        # batch of 1: prefer >=2 spatial tiles so both v7x TensorCores get work
        tile_cap = min(tile_cap, max(128, _round_up(pl.cdiv(s_ceil, 2), 128)))
    n_s = pl.cdiv(s_ceil, tile_cap)
    tile_s = _round_up(pl.cdiv(s_ceil, n_s), 128)
    s_tiles = pl.cdiv(S, tile_s)

    # ---- small-spatial case: fold several batch images into one grid step ----
    b_tile = 1
    if s_tiles == 1 and tile_s < lane_target and N > 1:
        per_img = 2 * tile_s * (C_in * in_bytes + C_out * out_bytes)
        b_vmem = max(1, (vmem_budget_bytes - fixed_bytes - C_out * tile_s * 4) // per_img)
        b_tile = max(1, min(N, lane_target // tile_s, int(b_vmem)))
        b_tile = min(b_tile, pl.cdiv(N, 2))   # keep >= 2 steps for v7x's 2 TCs

    grid = (pl.cdiv(N, b_tile), s_tiles)

    need_bytes = (2 * b_tile * tile_s * (C_in * in_bytes + C_out * out_bytes)
                  + fixed_bytes + C_out * tile_s * 4)
    vmem_limit = int(min(max(need_bytes + (8 << 20), 32 << 20), 56 << 20))

    cost = pl.CostEstimate(
        flops=2 * N * C_out * C_in * S,
        bytes_accessed=(N * C_in * S * in_bytes + N * C_out * S * out_bytes
                        + C_out * C_in * in_bytes + C_out * 4),
        transcendentals=0)

    out_flat = pl.pallas_call(
        _gating_kernel,
        out_shape=jax.ShapeDtypeStruct((N, C_out, S), out_dtype),
        grid_spec=pltpu.PrefetchScalarGridSpec(
            num_scalar_prefetch=0,
            grid=grid,
            in_specs=[
                # x slab: batch tile, full channels, spatial on lanes
                pl.BlockSpec((b_tile, C_in, tile_s), lambda n, s: (n, 0, s)),
                # folded weight: resident (constant index_map)
                pl.BlockSpec((C_out, C_in), lambda n, s: (0, 0)),
                # folded shift: resident
                pl.BlockSpec((C_out, 1), lambda n, s: (0, 0)),
            ],
            out_specs=pl.BlockSpec((b_tile, C_out, tile_s), lambda n, s: (n, 0, s)),
        ),
        compiler_params=pltpu.CompilerParams(
            dimension_semantics=("parallel", "parallel"),
            vmem_limit_bytes=vmem_limit),
        cost_estimate=cost,
    )(x_flat, w_eff, shift_eff)

    return out_flat.reshape(N, C_out, H, W)        # already NCHW, no pad/slice


if __name__ == "__main__":
    # Small shapes consistent with the module: N=2, C_in=4, C_out=8, H=W=16
    N, C_in, C_out, H, W = 2, 4, 8, 16, 16

    key = jax.random.PRNGKey(0)
    k_x, k_w, k_b, k_g, k_be, k_m, k_v = jax.random.split(key, 7)

    x = jax.random.normal(k_x, (N, C_in, H, W), dtype=jnp.float32)
    conv_w = jax.random.normal(k_w, (C_out, C_in, 1, 1), dtype=jnp.float32) * 0.1
    conv_b = jax.random.normal(k_b, (C_out,), dtype=jnp.float32) * 0.1
    bn_gamma = jax.random.normal(k_g, (C_out,), dtype=jnp.float32) * 0.1 + 1.0
    bn_beta = jax.random.normal(k_be, (C_out,), dtype=jnp.float32) * 0.1
    bn_mean = jax.random.normal(k_m, (C_out,), dtype=jnp.float32) * 0.1
    bn_var = jax.nn.softplus(jax.random.normal(k_v, (C_out,), dtype=jnp.float32)) + 0.5

    out = unet_grid_gating_signal2(x, conv_w, conv_b,
                                   bn_gamma, bn_beta, bn_mean, bn_var)
    jax.block_until_ready(out)

    # Pure-JAX f32 reference: 1x1 conv == channel matmul, eval-mode BN, ReLU.
    ref = jnp.einsum('nchw,oc->nohw', x, conv_w.reshape(C_out, C_in))
    ref = ref + conv_b[None, :, None, None]
    ref = (ref - bn_mean[None, :, None, None]) / jnp.sqrt(
        bn_var + 1e-5)[None, :, None, None]
    ref = ref * bn_gamma[None, :, None, None] + bn_beta[None, :, None, None]
    ref = jnp.maximum(ref, 0.0)

    assert out.shape == (N, C_out, H, W)
    assert jnp.all(jnp.isfinite(out))
    # bf16 inputs/weights -> relaxed tolerance vs. the f32 reference.
    assert jnp.allclose(out.astype(jnp.float32), ref, atol=2e-2, rtol=2e-2)

    print("KERNEL_OK")
</pallas_src>

<mosaic_0001>
module attributes {stable_mosaic.version = 11 : i64} {
  func.func @_gating_kernel(%arg0: i32, %arg1: i32, %arg2: memref<1x4x256xbf16, #tpu.memory_space<vmem>>, %arg3: memref<8x4xbf16, #tpu.memory_space<vmem>>, %arg4: memref<8x1xf32, #tpu.memory_space<vmem>>, %arg5: memref<1x8x256xf32, #tpu.memory_space<vmem>>) attributes {dimension_semantics = [#tpu.dimension_semantics<parallel>, #tpu.dimension_semantics<parallel>], iteration_bounds = array<i64: 2, 1>, scalar_prefetch = 0 : i64, scratch_operands = 0 : i64, tpu.core_type = #tpu.core_type<tc>, window_params = [{transform_indices = @transform_0, window_bounds = array<i64: 1, 4, 256>}, {pipeline_mode = #tpu.pipeline_mode<synchronous>, transform_indices = @transform_1, window_bounds = array<i64: 8, 4>}, {pipeline_mode = #tpu.pipeline_mode<synchronous>, transform_indices = @transform_2, window_bounds = array<i64: 8, 1>}, {transform_indices = @transform_3, window_bounds = array<i64: 1, 8, 256>}]} {
    %c0 = arith.constant 0 : index
    %c0_0 = arith.constant 0 : index
    %0 = vector.load %arg3[%c0, %c0_0] : memref<8x4xbf16, #tpu.memory_space<vmem>>, vector<8x4xbf16>
    %c0_1 = arith.constant 0 : index
    %c0_2 = arith.constant 0 : index
    %1 = vector.load %arg4[%c0_1, %c0_2] : memref<8x1xf32, #tpu.memory_space<vmem>>, vector<8x1xf32>
    %c0_3 = arith.constant 0 : index
    %c0_4 = arith.constant 0 : index
    %c0_5 = arith.constant 0 : index
    %2 = vector.load %arg2[%c0_3, %c0_4, %c0_5] : memref<1x4x256xbf16, #tpu.memory_space<vmem>>, vector<1x4x256xbf16>
    %3 = vector.shape_cast %2 : vector<1x4x256xbf16> to vector<4x256xbf16>
    %cst = arith.constant dense<0.000000e+00> : vector<8x256xf32>
    %4 = tpu.matmul %0, %3, %cst {dimension_numbers = #tpu.dot_dimension_numbers<[1], [0], [0], [1], [0, 0, 1, 1], [], []>} : vector<8x4xbf16>, vector<4x256xbf16>, vector<8x256xf32> -> vector<8x256xf32>
    %5 = vector.broadcast %1 : vector<8x1xf32> to vector<8x256xf32>
    %6 = arith.addf %4, %5 : vector<8x256xf32>
    %cst_6 = arith.constant 0.000000e+00 : f32
    %7 = vector.broadcast %cst_6 : f32 to vector<8x256xf32>
    %8 = arith.maximumf %6, %7 : vector<8x256xf32>
    %c0_7 = arith.constant 0 : index
    %c0_8 = arith.constant 0 : index
    %c0_9 = arith.constant 0 : index
    %9 = vector.load %arg5[%c0_7, %c0_8, %c0_9] : memref<1x8x256xf32, #tpu.memory_space<vmem>>, vector<1x8x256xf32>
    %10 = vector.shape_cast %9 : vector<1x8x256xf32> to vector<8x256xf32>
    %11 = vector.shape_cast %8 : vector<8x256xf32> to vector<1x8x256xf32>
    tpu.vector_store %arg5[%c0_7, %c0_8, %c0_9], %11 {strides = array<i32>} : memref<1x8x256xf32, #tpu.memory_space<vmem>>, vector<1x8x256xf32>,
    return
  }
  func.func @transform_0(%arg0: i32, %arg1: i32) -> (i32, i32, i32) {
    %c0_i32 = arith.constant 0 : i32
    %c0_i32_0 = arith.constant 0 : i32
    return %arg0, %c0_i32, %arg1 : i32, i32, i32
  }
  func.func @transform_1(%arg0: i32, %arg1: i32) -> (i32, i32) {
    %c0_i32 = arith.constant 0 : i32
    %c0_i32_0 = arith.constant 0 : i32
    %c0_i32_1 = arith.constant 0 : i32
    return %c0_i32, %c0_i32_0 : i32, i32
  }
  func.func @transform_2(%arg0: i32, %arg1: i32) -> (i32, i32) {
    %c0_i32 = arith.constant 0 : i32
    %c0_i32_0 = arith.constant 0 : i32
    %c0_i32_1 = arith.constant 0 : i32
    return %c0_i32, %c0_i32_0 : i32, i32
  }
  func.func @transform_3(%arg0: i32, %arg1: i32) -> (i32, i32, i32) {
    %c0_i32 = arith.constant 0 : i32
    %c0_i32_0 = arith.constant 0 : i32
    return %arg0, %c0_i32, %arg1 : i32, i32, i32
  }
}

</mosaic_0001>

<llo_original>
// kernel: tpu_custom_call.1
$region0: #{tpu_custom_call.1}
  #allocation0 [shape = 'u32[]', space=smem, size = 0x4, offset = 0x4, fixed_abs, tag = 'smem constant byte address 0x4 - core index']
  #allocation1 [shape = 'u32[72,128]{1,0:T(1,128)}', space=vmem, size = 0x9000, scoped, tag = 'internal scratch']
  %s0 = inlined_call_operand.vmem [shape: bf16[2,4,256], index: 0, kind: input, shape index: {}]
  %s1 = inlined_call_operand.vmem [shape: bf16[8,4], index: 1, kind: input, shape index: {}]
  %s2 = inlined_call_operand.vmem [shape: f32[8,1], index: 2, kind: input, shape index: {}]
  %s3 = inlined_call_operand.hbm [shape: f32[2,8,256], index: 3, kind: output, shape index: {}]
  %s4 = sld [smem:[#allocation0]]
  $region45: #{tpu_custom_call.1} parent=0
    _
  %s6 = ssub.s32 1, %s4
  %s7 = scalar_select 0, %s6, %s4
  $region1: #{tpu_custom_call.1} parent=0
    #allocation2 [shape = 'u8[16384]{0}', space=vmem, size = 0x4000, scoped, tag = 'output window, operand 0']
    #allocation3 [shape = 's32[2]{0}', space=sflag, size = 0x8, scoped, tag = 'scoped memory for tpu_custom_call.1']
    %8 = vsyncpa [#allocation3], 0
    %s9 = scalar_lea.sflag [#allocation3], 1
    %10 = vsyncpa %s9, 0
    loop: start=0, step=1, limit=4
    $region2: #{tpu_custom_call.1} parent=1 // loop_pre_header
      _
    $region3: #{tpu_custom_call.1} parent=1 // loop_header
      %s12 = sphi 0, %s16
      %p13 = scmp.ge.s32.totalorder %s12, 4
      %s19 = sphi 0, %s31
      %s20 = sphi 0, %s27
      %s21 = sphi 0, %s19
      %s22 = sphi 0, %s20
      %s23 = sphi 0, %s21
      %s24 = sphi 0, %s22
      %s36 = sphi 0, %s38
      %s39 = sphi 0, %s36
      %s40 = sphi 0, %s39
      %s56 = sphi 0, %s40
      %s60 = sphi 0, %s60
      %s62 = sphi 0, %s60
      %s63 = sphi 0, %s62
      %s77 = sphi 0, %s63
      %s81 = sphi 0, %s81
      %s83 = sphi 0, %s81
      %s84 = sphi 0, %s83
      %s98 = sphi 0, %s84
      %s106 = sphi 0, %s108
      %s109 = sphi 0, %s106
      %s110 = sphi 0, %s109
      %s126 = sphi 0, %s110
    $region4: #{tpu_custom_call.1} parent=1 // loop_header_branch
      %15 = sbr.rel (%p13) target = $region8
    $region5: #{tpu_custom_call.1} parent=1 // loop_body
      %s17 = ssub.s32 %s12, 1
      %s18 = ssub.s32 %s12, 2
      %s25 = sadd.s32 1, %s20
      %p26 = scmp.ge.s32.totalorder %s25, 1
      %s27 = scalar_select %p26, 0, %s25
      %s28 = sadd.s32 1, %s19
      %s29 = scalar_select %p26, %s28, %s19
      %p30 = scmp.ge.s32.totalorder %s29, 2
      %s31 = scalar_select %p30, 0, %s29
      %s32 = ssub.s32 %s19, %s31
      %s33 = ssub.s32 %s20, %s27
      %s34 = sor.u32 %s32, %s33
      %p35 = scmp.eq.s32.totalorder %s34, 0
      %s37 = sadd.s32 %s36, 1
      %s38 = scalar_select %p35, %s36, %s37
      %p41 = pneg %p35
      %p42 = scmp.eq.s32.totalorder %s12, 1
      %p43 = por %p41, %p42
      %p44 = scmp.ne.s32.totalorder %s36, %s39
      %p45 = scmp.eq.s32.totalorder %s12, 0
      %p46 = por %p44, %p45
      %p47 = scmp.ne.s32.totalorder %s36, %s39
      %p48 = scmp.eq.s32.totalorder %s17, 1
      %p49 = por %p47, %p48
      %p50 = scmp.ne.s32.totalorder %s39, %s40
      %p51 = scmp.eq.s32.totalorder %s17, 0
      %p52 = por %p50, %p51
      %p53 = scmp.ne.s32.totalorder %s39, %s40
      %p54 = scmp.eq.s32.totalorder %s18, 1
      %p55 = por %p53, %p54
      %p57 = scmp.ne.s32.totalorder %s40, %s56
      %p58 = scmp.eq.s32.totalorder %s18, 0
      %p59 = por %p57, %p58
      %s61 = sadd.s32 %s60, 1
      %p64 = scmp.eq.s32.totalorder %s12, 1
      %p65 = scmp.ne.s32.totalorder %s60, %s62
      %p66 = scmp.eq.s32.totalorder %s12, 0
      %p67 = por %p65, %p66
      %p68 = scmp.ne.s32.totalorder %s60, %s62
      %p69 = scmp.eq.s32.totalorder %s17, 1
      %p70 = por %p68, %p69
      %p71 = scmp.ne.s32.totalorder %s62, %s63
      %p72 = scmp.eq.s32.totalorder %s17, 0
      %p73 = por %p71, %p72
      %p74 = scmp.ne.s32.totalorder %s62, %s63
      %p75 = scmp.eq.s32.totalorder %s18, 1
      %p76 = por %p74, %p75
      %p78 = scmp.ne.s32.totalorder %s63, %s77
      %p79 = scmp.eq.s32.totalorder %s18, 0
      %p80 = por %p78, %p79
      %s82 = sadd.s32 %s81, 1
      %p85 = scmp.eq.s32.totalorder %s12, 1
      %p86 = scmp.ne.s32.totalorder %s81, %s83
      %p87 = scmp.eq.s32.totalorder %s12, 0
      %p88 = por %p86, %p87
      %p89 = scmp.ne.s32.totalorder %s81, %s83
      %p90 = scmp.eq.s32.totalorder %s17, 1
      %p91 = por %p89, %p90
      %p92 = scmp.ne.s32.totalorder %s83, %s84
      %p93 = scmp.eq.s32.totalorder %s17, 0
      %p94 = por %p92, %p93
      %p95 = scmp.ne.s32.totalorder %s83, %s84
      %p96 = scmp.eq.s32.totalorder %s18, 1
      %p97 = por %p95, %p96
      %p99 = scmp.ne.s32.totalorder %s84, %s98
      %p100 = scmp.eq.s32.totalorder %s18, 0
      %p101 = por %p99, %p100
      %s102 = ssub.s32 %s19, %s31
      %s103 = ssub.s32 %s20, %s27
      %s104 = sor.u32 %s102, %s103
      %p105 = scmp.eq.s32.totalorder %s104, 0
      %s107 = sadd.s32 %s106, 1
      %s108 = scalar_select %p105, %s106, %s107
      %p111 = pneg %p105
      %p112 = scmp.eq.s32.totalorder %s12, 1
      %p113 = por %p111, %p112
      %p114 = scmp.ne.s32.totalorder %s106, %s109
      %p115 = scmp.eq.s32.totalorder %s12, 0
      %p116 = por %p114, %p115
      %p117 = scmp.ne.s32.totalorder %s106, %s109
      %p118 = scmp.eq.s32.totalorder %s17, 1
      %p119 = por %p117, %p118
      %p120 = scmp.ne.s32.totalorder %s109, %s110
      %p121 = scmp.eq.s32.totalorder %s17, 0
      %p122 = por %p120, %p121
      %p123 = scmp.ne.s32.totalorder %s109, %s110
      %p124 = scmp.eq.s32.totalorder %s18, 1
      %p125 = por %p123, %p124
      %p127 = scmp.ne.s32.totalorder %s110, %s126
      %p128 = scmp.eq.s32.totalorder %s18, 0
      %p129 = por %p127, %p128
      %p130 = scmp.le.s32.totalorder 1, %s12
      %p131 = scmp.lt.s32.totalorder %s12, 3
      %p132 = pnand %p130, %p131
      %p133 = pneg %p132
      // Predicated region
      $region9: #{tpu_custom_call.1} parent=5 // pred_check
        _
      $region10: #{tpu_custom_call.1} parent=5 // pred_check_branch
        %135 = sbr.rel (%p132) target = $region12
      $region11: #{tpu_custom_call.1} parent=5 // pred_region
        %s136 = ssub.s32 %s12, 1
        // Predicated region
        $region13: #{tpu_custom_call.1} parent=11 // pred_check
          %p137 = pneg %p73
        $region14: #{tpu_custom_call.1} parent=11 // pred_check_branch
          %139 = sbr.rel (%p137) target = $region16
        $region15: #{tpu_custom_call.1} parent=11 // pred_region
          _
        $region16: #{tpu_custom_call.1} parent=11 // pred_fallthru
          _
        // Predicated region
        $region17: #{tpu_custom_call.1} parent=11 // pred_check
          %p140 = pneg %p94
        $region18: #{tpu_custom_call.1} parent=11 // pred_check_branch
          %142 = sbr.rel (%p140) target = $region20
        $region19: #{tpu_custom_call.1} parent=11 // pred_region
          _
        $region20: #{tpu_custom_call.1} parent=11 // pred_fallthru
          _
      $region12: #{tpu_custom_call.1} parent=5 // pred_fallthru
        _
      %p143 = scmp.lt.s32.totalorder %s12, 2
      // Predicated region
      $region21: #{tpu_custom_call.1} parent=5 // pred_check
        %p144 = pneg %p143
      $region22: #{tpu_custom_call.1} parent=5 // pred_check_branch
        %146 = sbr.rel (%p144) target = $region24
      $region23: #{tpu_custom_call.1} parent=5 // pred_region
        // Predicated region
        $region25: #{tpu_custom_call.1} parent=23 // pred_check
          %p147 = pneg %p46
        $region26: #{tpu_custom_call.1} parent=23 // pred_check_branch
          %149 = sbr.rel (%p147) target = $region28
        $region27: #{tpu_custom_call.1} parent=23 // pred_region
          %s150 = smul.u32 2, %s20
          %p151 = scmp.lt.s32.totalorder %s19, 1
          %s152 = scalar_select %p151, %s19, 1
          %p153 = scmp.lt.s32.totalorder %s150, 1
          %s154 = scalar_select %p153, %s150, 1
          %s155 = smul.addr %s152, 2
          %s156 = sadd.s32 %s154, %s155
          %s157 = smul.addr %s156, 2
          %s158 = scalar_lea.vmem %s0, %s157
          %s159 = smul.u32 2, %s20
        $region28: #{tpu_custom_call.1} parent=23 // pred_fallthru
          _
      $region24: #{tpu_custom_call.1} parent=5 // pred_fallthru
        _
      %p160 = scmp.le.s32.totalorder 1, %s12
      %p161 = scmp.lt.s32.totalorder %s12, 3
      %p162 = pnand %p160, %p161
      %p163 = pneg %p162
      // Predicated region
      $region29: #{tpu_custom_call.1} parent=5 // pred_check
        _
      $region30: #{tpu_custom_call.1} parent=5 // pred_check_branch
        %165 = sbr.rel (%p162) target = $region32
      $region31: #{tpu_custom_call.1} parent=5 // pred_region
        %s166 = ssub.s32 %s12, 1
        %s167 = smul.u32 2, %s22
        %p168 = scmp.lt.s32.totalorder %s21, 1
        %s169 = scalar_select %p168, %s21, 1
        %p170 = scmp.lt.s32.totalorder %s167, 1
        %s171 = scalar_select %p170, %s167, 1
        %s172 = smul.addr %s169, 2
        %s173 = sadd.s32 %s171, %s172
        %s174 = smul.addr %s173, 2
        %s175 = scalar_lea.vmem %s0, %s174
        %p176 = pneg %p52
        %p177 = pneg %p49
        %p178 = pneg %p73
        %p179 = pneg %p70
        %p180 = pneg %p94
        %p181 = pneg %p91
        %p182 = pneg %p122
        %p183 = pneg %p119
        %s184 = sand.u32 %s109, 1
        %s185 = scalar_lea.sflag [#allocation3], %s184
        %s186 = sand.u32 %s109, 1
        %s187 = smul.addr %s186, 16
        %s188 = scalar_lea.vmem [#allocation2], %s187
        %s189 = smul.u32 2, %s22
        %p190 = scmp.lt.s32.totalorder %s21, 1
        %s191 = scalar_select %p190, %s21, 1
        %p192 = scmp.lt.s32.totalorder %s189, 1
        %s193 = scalar_select %p192, %s189, 1
        %s194 = smul.addr %s191, 2
        %s195 = sadd.s32 %s193, %s194
        %s196 = smul.addr %s195, 2
        %s197 = scalar_lea.vmem %s0, %s196
        %s198 = smul.u32 2, %s22
        %s199 = smul.u32 2, %s22
        %v201 = vld [vmem:[%s1] sm:$0xf]
        %v202 = vld [vmem:[%s2] sm:$0xff]
        %v203 = vld [vmem:[%s197] sm:$0xf]
        %205 = vset.pattern.permute.xlu0 0
        %206 = vperm.xlu0 %205, %v202
        %v207 = vpop.permute.xlu0 %206
        %210 = vst [vmem:[#allocation1] ss:$4 sm:$0xff] %v203
        %v211 = vld.sshfl [vmem:[#allocation1] sm:$0xff pattern:$0x73625140]
        %v212 = vld.sshfl [vmem:[#allocation1 + $0x8] sm:$0xff pattern:$0x73625140]
        %vm213 = vcmask 31744
        %v215 = vsel %vm213, %v201, 0
        %vm217 = vcmask 1041408
        %v218 = vsel %vm217, %v211, 0
        %v220 = vsel %vm217, %v212, 0
        %222 = vmatpush.bf16.msra.mxu0 0
        %223 = vmatpush.bf16.msra.mxu0 0
        %224 = vmatpush.bf16.msra.mxu0 0
        %225 = vmatpush.bf16.msra.mxu0 0
        %226 = vmatpush.bf16.msra.mxu0 0
        %227 = vmatpush.bf16.msra.mxu0 0
        %228 = vmatpush.bf16.msra.mxu0 0
        %229 = vmatpush.bf16.msra.mxu0 %v218
        %230 = vmatmul.bf16.gmra.mxu0 %v215
        %v231 = vpop.f32.mrf.mxu0
        %v232 = vadd.f32 %v207, %v231
        %v233 = vpop.f32.mrf.mxu0
        %234 = vdwg.mxu0
        %235 = vmatpush.bf16.msra.mxu0 0
        %236 = vmatpush.bf16.msra.mxu0 0
        %237 = vmatpush.bf16.msra.mxu0 0
        %238 = vmatpush.bf16.msra.mxu0 0
        %239 = vmatpush.bf16.msra.mxu0 0
        %240 = vmatpush.bf16.msra.mxu0 0
        %241 = vmatpush.bf16.msra.mxu0 0
        %242 = vmatpush.bf16.msra.mxu0 %v220
        %243 = vmatmul.bf16.gmra.mxu0 %v215
        %v244 = vpop.f32.mrf.mxu0
        %v245 = vadd.f32 %v207, %v244
        %v246 = vpop.f32.mrf.mxu0
        %247 = vdwg.mxu0
        %v248 = vmax.f32 %v232, 0.0
        %v249 = vmax.f32 %v245, 0.0
        %250 = vst [vmem:[%s188] sm:$0xff] %v248
        %251 = vst [vmem:[%s188 + $0x8] sm:$0xff] %v249
        %s252 = sand.u32 %s109, 1
        %s253 = scalar_lea.sflag [#allocation3], %s252
        %s254 = sand.u32 %s109, 1
        %s255 = smul.addr %s254, 16
        %s256 = scalar_lea.vmem [#allocation2], %s255
        // Predicated region
        $region33: #{tpu_custom_call.1} parent=31 // pred_check
          %p257 = pneg %p119
        $region34: #{tpu_custom_call.1} parent=31 // pred_check_branch
          %259 = sbr.rel (%p257) target = $region36
        $region35: #{tpu_custom_call.1} parent=31 // pred_region
          %s260 = smul.u32 2, %s22
          %262 = vsyncadd %s253, 0
          %s263 = smul.addr %s21, 2
          %s264 = sadd.s32 %s260, %s263
          %s265 = smul.addr %s264, 8
          %s266 = scalar_lea.hbm %s3, %s265
          %s268 = sshll.u32 %s256, 4
          %s269 = int_to_ptr.vmem [resolvable:$true] %s268
          %s270 = sshll.u32 %s266, 4
          %s271 = int_to_ptr.hbm [resolvable:$true] %s270
          %273 = dma.vmem_to_hbm [thread:$0]  %s269, 256, %s271, %s253
        $region36: #{tpu_custom_call.1} parent=31 // pred_fallthru
          _
      $region32: #{tpu_custom_call.1} parent=5 // pred_fallthru
        _
      %p274 = scmp.le.s32.totalorder 2, %s12
      // Predicated region
      $region37: #{tpu_custom_call.1} parent=5 // pred_check
        %p275 = pneg %p274
      $region38: #{tpu_custom_call.1} parent=5 // pred_check_branch
        %277 = sbr.rel (%p275) target = $region40
      $region39: #{tpu_custom_call.1} parent=5 // pred_region
        %s278 = ssub.s32 %s12, 2
        // Predicated region
        $region41: #{tpu_custom_call.1} parent=39 // pred_check
          %p279 = pneg %p125
        $region42: #{tpu_custom_call.1} parent=39 // pred_check_branch
          %281 = sbr.rel (%p279) target = $region44
        $region43: #{tpu_custom_call.1} parent=39 // pred_region
          %s282 = sand.u32 %s110, 1
          %s283 = scalar_lea.sflag [#allocation3], %s282
          %s284 = sand.u32 %s110, 1
          %s285 = smul.addr %s284, 16
          %s286 = scalar_lea.vmem [#allocation2], %s285
          %288 = dma.done %s283, 256
        $region44: #{tpu_custom_call.1} parent=39 // pred_fallthru
          _
      $region40: #{tpu_custom_call.1} parent=5 // pred_fallthru
        _
    $region6: #{tpu_custom_call.1} parent=1 // loop_footer
      %s16 = sadd.s32 1, %s12
    $region7: #{tpu_custom_call.1} parent=1 // loop_footer_branch
      %11 = sbr.rel target = $region3
    $region8: #{tpu_custom_call.1} parent=1 // loop_exit
      _
    %289 = vsyncpa [#allocation3], 1
    %s290 = scalar_lea.sflag [#allocation3], 1
    %291 = vsyncpa %s290, 1

</llo_original>
